<compile_context>
chip_gen: v7x
topology: tpu7x:2x2x1
jax: 0.10.0
libtpu: 0.0.40
codegen_flags: <defaults>
</compile_context>

<pallas_src>
import functools
import math
from typing import Any, NamedTuple

import jax
import jax.numpy as jnp
from jax.experimental import pallas as pl
from jax.experimental.pallas import tpu as pltpu

_LANE = 128  # feature dims padded to multiples of this (lane-dense stores)


def _round_up(a, b):
    return ((a + b - 1) // b) * b


def _tpu_caps():
    """Returns (vmem_capacity_bytes, has_two_tensorcores)."""
    vmem_bytes = 64 << 20  # conservative default (v7x per-TC VMEM)
    try:
        vmem_bytes = int(pltpu.get_tpu_info().vmem_capacity_bytes)
    except Exception:
        pass
    two_cores = False
    try:
        kind = jax.devices()[0].device_kind.lower()
        # v4 / v5p megacore and v7x expose 2 TensorCores per device.
        two_cores = any(tag in kind for tag in ("v4", "v5p", "7"))
    except Exception:
        pass
    return vmem_bytes, two_cores


class PreparedParams(NamedTuple):
    num_layers: int
    dims: tuple      # unpadded feature dims (d_in, hidden, ..., d_out)
    dims_p: tuple    # lane-padded feature dims
    mxu_dtype: Any
    arrays: tuple    # (w0, b0, w1, b1, ...) already padded / cast


def prepare_params(weights, biases, mxu_dtype=jnp.bfloat16):
    """One-time parameter padding/cast (hoisted out of the per-call path).

    weights[i]: (in_i, out_i) (transposed vs. torch nn.Linear.weight),
    biases[i]: (out_i,).  Feature dims are zero-padded to multiples of 128 so
    matmuls and output stores are lane-dense; zero padding is exact because
    SiLU(0) = 0.  Weights stored in `mxu_dtype` (bf16 default), biases in f32.
    """
    num_layers = len(weights)
    dims = (weights[0].shape[0],) + tuple(w.shape[1] for w in weights)
    dims_p = tuple(_round_up(d, _LANE) for d in dims)
    arrays = []
    for i, (w, b) in enumerate(zip(weights, biases)):
        wp = jnp.pad(
            w.astype(mxu_dtype),
            ((0, dims_p[i] - dims[i]), (0, dims_p[i + 1] - dims[i + 1])))
        bp = jnp.pad(
            b.astype(jnp.float32).reshape(1, -1),
            ((0, 0), (0, dims_p[i + 1] - dims[i + 1])))
        arrays += [wp, bp]
    return PreparedParams(num_layers, dims, dims_p, mxu_dtype, tuple(arrays))


def _mlp_kernel(num_layers, mxu_dtype, x_ref, *refs):
    """refs = (w0, b0, ..., w{L-1}, b{L-1}, out_ref): one row tile through the
    whole MLP.  Matmul operands are `mxu_dtype`; accumulation / bias / SiLU f32."""
    out_ref = refs[-1]
    params = refs[:-1]
    h = x_ref[...].astype(mxu_dtype)                    # (rt, d_in_p)
    for i in range(num_layers):
        w = params[2 * i][...]                          # (in_p, out_p)
        b = params[2 * i + 1][...]                      # (1, out_p) f32
        acc = jnp.dot(h, w, preferred_element_type=jnp.float32) + b
        if i < num_layers - 1:
            acc = acc * jax.nn.sigmoid(acc)             # SiLU in f32 (EUP slot)
            h = acc.astype(mxu_dtype)                   # back to MXU dtype
        else:
            h = acc
    out_ref[...] = h.astype(out_ref.dtype)


def neural_long_term_memory_forward(x, params: PreparedParams, *, row_tile=None):
    """x: (B, S, d_model). Returns (B, S, d_model)."""
    B, S, d_model = x.shape
    assert d_model == params.dims[0]
    d_out, d_out_p = params.dims[-1], params.dims_p[-1]
    d_in_p = params.dims_p[0]
    N = B * S

    vmem_bytes, two_cores = _tpu_caps()

    mxu_itemsize = jnp.dtype(params.mxu_dtype).itemsize
    granule = 16 if mxu_itemsize == 2 else 8   # bf16 packs two rows per sublane

    # ---- row tiling (no row padding; partial last block is masked by Pallas)
    if row_tile is None:
        row_tile = 1024 if vmem_bytes >= (100 << 20) else 512
    rt = min(row_tile, _round_up(N, granule))
    if two_cores and N > granule:
        # keep >= 2 grid steps so both TensorCores (v7x / megacore) get work
        rt = min(rt, _round_up((N + 1) // 2, granule))
    rt = _round_up(max(rt, granule), granule)
    num_tiles = pl.cdiv(N, rt)

    # ---- activations: no HBM pad pass when d_model is already lane-aligned
    x2 = x.reshape(N, d_model)
    if d_in_p != d_model:
        x2 = jnp.pad(x2, ((0, 0), (0, d_in_p - d_model)))

    x_itemsize = jnp.dtype(x2.dtype).itemsize
    out_itemsize = jnp.dtype(x.dtype).itemsize
    param_bytes = sum(int(p.size) * p.dtype.itemsize for p in params.arrays)

    # ---- advisory cost estimate for the XLA scheduler
    flops = 2 * N * sum(params.dims_p[i] * params.dims_p[i + 1]
                        for i in range(params.num_layers))
    transcendentals = N * sum(params.dims_p[i + 1]
                              for i in range(params.num_layers - 1))
    bytes_accessed = (N * d_in_p * x_itemsize + N * d_out_p * out_itemsize
                      + param_bytes)
    cost = pl.CostEstimate(flops=int(flops),
                           transcendentals=int(transcendentals),
                           bytes_accessed=int(bytes_accessed))

    # ---- VMEM budget: double-buffered x/out tiles + single resident copy of
    #      params + f32 intermediates; cap at 80% of physical VMEM so v7x
    #      (64 MiB) keeps headroom while v5e/v6e (128 MiB) can use big tiles.
    max_dim_p = max(params.dims_p)
    need = (2 * rt * d_in_p * x_itemsize
            + 2 * rt * d_out_p * out_itemsize
            + param_bytes
            + 4 * rt * max_dim_p * 4)
    vmem_ceiling = int(vmem_bytes * 0.8)
    vmem_limit = int(min(max(int(1.5 * need), 32 << 20), vmem_ceiling))
    # TODO(synk): if param_bytes alone approaches vmem_ceiling (large
    # d_model/hidden on v7x's 64 MiB), tile the contraction with a K grid axis
    # + f32 scratch accumulator instead of VMEM-resident whole weights.

    kernel = functools.partial(_mlp_kernel, params.num_layers, params.mxu_dtype)
    x_spec = pl.BlockSpec((rt, d_in_p), lambda i: (i, 0))
    out_spec = pl.BlockSpec((rt, d_out_p), lambda i: (i, 0))
    out_shape = jax.ShapeDtypeStruct((N, d_out_p), x.dtype)

    def _run(resident_params):
        if resident_params:
            # Grid-invariant params: whole array resident in VMEM once (no
            # per-step double-buffering -> half the param VMEM footprint).
            p_specs = [pl.BlockSpec(memory_space=pltpu.MemorySpace.VMEM)
                       for _ in params.arrays]
        else:
            p_specs = [pl.BlockSpec(p.shape, lambda i: (0, 0))
                       for p in params.arrays]
        return pl.pallas_call(
            kernel,
            out_shape=out_shape,
            grid_spec=pltpu.PrefetchScalarGridSpec(
                num_scalar_prefetch=0,
                grid=(num_tiles,),
                in_specs=[x_spec] + p_specs,
                out_specs=out_spec,
            ),
            compiler_params=pltpu.CompilerParams(
                dimension_semantics=("parallel",),
                vmem_limit_bytes=vmem_limit,
            ),
            cost_estimate=cost,
        )(x2, *params.arrays)

    try:
        out = _run(True)
    except Exception:
        # Fallback: standard pipelined whole-array param blocks.
        out = _run(False)

    if d_out_p != d_out:
        out = out[:, :d_out]          # only when feature padding was applied
    return out.reshape(B, S, d_out)


def init_params(key, d_model, hidden_dim, num_layers):
    """Mimics torch.nn.Linear default init U(-1/sqrt(in), 1/sqrt(in))."""
    weights, biases = [], []
    in_dim = d_model
    for i in range(num_layers):
        out_dim = hidden_dim if i < num_layers - 1 else d_model
        key, kw, kb = jax.random.split(key, 3)
        bound = 1.0 / math.sqrt(in_dim)
        # stored transposed relative to torch: (in, out) so kernel does h @ W + b
        w = jax.random.uniform(kw, (in_dim, out_dim), jnp.float32, -bound, bound)
        b = jax.random.uniform(kb, (out_dim,), jnp.float32, -bound, bound)
        weights.append(w)
        biases.append(b)
        in_dim = out_dim
    return weights, biases


def reference_forward(x, weights, biases):
    num_layers = len(weights)
    h = x.astype(jnp.float32)
    for i, (w, b) in enumerate(zip(weights, biases)):
        h = h @ w + b
        if i < num_layers - 1:
            h = h * jax.nn.sigmoid(h)
    return h


if __name__ == "__main__":
    d_model, hidden_dim, num_layers = 32, 64, 3
    B, S = 2, 8

    key = jax.random.PRNGKey(0)
    key, kx = jax.random.split(key)
    x = jax.random.normal(kx, (B, S, d_model), jnp.float32)
    weights, biases = init_params(key, d_model, hidden_dim, num_layers)
    ref = reference_forward(x, weights, biases)

    # Strict f32 path (MXU operands kept f32) — tight tolerance.
    params_f32 = prepare_params(weights, biases, mxu_dtype=jnp.float32)
    out = jax.block_until_ready(neural_long_term_memory_forward(x, params_f32))
    assert out.shape == (B, S, d_model)
    assert jnp.allclose(out.astype(jnp.float32), ref, atol=1e-4, rtol=1e-4), \
        "f32 mismatch vs reference"

    # Default path: bf16 MXU operands + f32 accumulation (intentional precision
    # trade vs. the all-f32 torch module; loose tolerance documents that).
    params_bf16 = prepare_params(weights, biases)  # mxu_dtype=bf16
    out_fast = jax.block_until_ready(
        neural_long_term_memory_forward(x, params_bf16))
    assert out_fast.shape == (B, S, d_model)
    assert jnp.allclose(out_fast.astype(jnp.float32), ref, atol=3e-2, rtol=5e-2), \
        "bf16-MXU mismatch vs reference"

    # bf16 activations end-to-end.
    x_bf = x.astype(jnp.bfloat16)
    out_bf = jax.block_until_ready(
        neural_long_term_memory_forward(x_bf, params_bf16))
    ref_bf = reference_forward(x_bf.astype(jnp.float32), weights, biases)
    assert out_bf.shape == (B, S, d_model)
    assert jnp.allclose(out_bf.astype(jnp.float32), ref_bf, atol=3e-2, rtol=5e-2), \
        "bf16 mismatch vs reference"

    # TODO(synk): update_memory (online gradient / momentum parameter update) is
    # a training-time side effect, not part of forward; not implemented here.
    print("KERNEL_OK")
</pallas_src>

<mosaic_0001>
module attributes {stable_mosaic.version = 11 : i64} {
  func.func @_mlp_kernel(%arg0: i32, %arg1: memref<16x128xf32, #tpu.memory_space<vmem>>, %arg2: memref<128x128xf32, #tpu.memory_space<vmem>>, %arg3: memref<1x128xf32, #tpu.memory_space<vmem>>, %arg4: memref<128x128xf32, #tpu.memory_space<vmem>>, %arg5: memref<1x128xf32, #tpu.memory_space<vmem>>, %arg6: memref<128x128xf32, #tpu.memory_space<vmem>>, %arg7: memref<1x128xf32, #tpu.memory_space<vmem>>, %arg8: memref<16x128xf32, #tpu.memory_space<vmem>>) attributes {dimension_semantics = [#tpu.dimension_semantics<parallel>], iteration_bounds = array<i64: 1>, scalar_prefetch = 0 : i64, scratch_operands = 0 : i64, tpu.core_type = #tpu.core_type<tc>, window_params = [{transform_indices = @transform_0, window_bounds = array<i64: 16, 128>}, {pipeline_mode = #tpu.pipeline_mode<synchronous>, transform_indices = @transform_1, window_bounds = array<i64: 128, 128>}, {pipeline_mode = #tpu.pipeline_mode<synchronous>, transform_indices = @transform_2, window_bounds = array<i64: 1, 128>}, {pipeline_mode = #tpu.pipeline_mode<synchronous>, transform_indices = @transform_3, window_bounds = array<i64: 128, 128>}, {pipeline_mode = #tpu.pipeline_mode<synchronous>, transform_indices = @transform_4, window_bounds = array<i64: 1, 128>}, {pipeline_mode = #tpu.pipeline_mode<synchronous>, transform_indices = @transform_5, window_bounds = array<i64: 128, 128>}, {pipeline_mode = #tpu.pipeline_mode<synchronous>, transform_indices = @transform_6, window_bounds = array<i64: 1, 128>}, {transform_indices = @transform_7, window_bounds = array<i64: 16, 128>}]} {
    %c0 = arith.constant 0 : index
    %c0_0 = arith.constant 0 : index
    %0 = vector.load %arg1[%c0, %c0_0] : memref<16x128xf32, #tpu.memory_space<vmem>>, vector<16x128xf32>
    %c0_1 = arith.constant 0 : index
    %c0_2 = arith.constant 0 : index
    %1 = vector.load %arg2[%c0_1, %c0_2] : memref<128x128xf32, #tpu.memory_space<vmem>>, vector<128x128xf32>
    %c0_3 = arith.constant 0 : index
    %c0_4 = arith.constant 0 : index
    %2 = vector.load %arg3[%c0_3, %c0_4] : memref<1x128xf32, #tpu.memory_space<vmem>>, vector<1x128xf32>
    %cst = arith.constant dense<0.000000e+00> : vector<16x128xf32>
    %3 = tpu.matmul %0, %1, %cst {dimension_numbers = #tpu.dot_dimension_numbers<[1], [0], [0], [1], [0, 0, 1, 1], [], []>} : vector<16x128xf32>, vector<128x128xf32>, vector<16x128xf32> -> vector<16x128xf32>
    %4 = vector.broadcast %2 : vector<1x128xf32> to vector<16x128xf32>
    %5 = arith.addf %3, %4 : vector<16x128xf32>
    %6 = arith.negf %5 : vector<16x128xf32>
    %7 = math.exp %6 : vector<16x128xf32>
    %cst_5 = arith.constant 1.000000e+00 : f32
    %8 = vector.broadcast %cst_5 : f32 to vector<16x128xf32>
    %9 = arith.addf %8, %7 : vector<16x128xf32>
    %10 = arith.divf %8, %9 : vector<16x128xf32>
    %11 = arith.mulf %5, %10 : vector<16x128xf32>
    %c0_6 = arith.constant 0 : index
    %c0_7 = arith.constant 0 : index
    %12 = vector.load %arg4[%c0_6, %c0_7] : memref<128x128xf32, #tpu.memory_space<vmem>>, vector<128x128xf32>
    %c0_8 = arith.constant 0 : index
    %c0_9 = arith.constant 0 : index
    %13 = vector.load %arg5[%c0_8, %c0_9] : memref<1x128xf32, #tpu.memory_space<vmem>>, vector<1x128xf32>
    %cst_10 = arith.constant dense<0.000000e+00> : vector<16x128xf32>
    %14 = tpu.matmul %11, %12, %cst_10 {dimension_numbers = #tpu.dot_dimension_numbers<[1], [0], [0], [1], [0, 0, 1, 1], [], []>} : vector<16x128xf32>, vector<128x128xf32>, vector<16x128xf32> -> vector<16x128xf32>
    %15 = vector.broadcast %13 : vector<1x128xf32> to vector<16x128xf32>
    %16 = arith.addf %14, %15 : vector<16x128xf32>
    %17 = arith.negf %16 : vector<16x128xf32>
    %18 = math.exp %17 : vector<16x128xf32>
    %cst_11 = arith.constant 1.000000e+00 : f32
    %19 = vector.broadcast %cst_11 : f32 to vector<16x128xf32>
    %20 = arith.addf %19, %18 : vector<16x128xf32>
    %21 = arith.divf %19, %20 : vector<16x128xf32>
    %22 = arith.mulf %16, %21 : vector<16x128xf32>
    %c0_12 = arith.constant 0 : index
    %c0_13 = arith.constant 0 : index
    %23 = vector.load %arg6[%c0_12, %c0_13] : memref<128x128xf32, #tpu.memory_space<vmem>>, vector<128x128xf32>
    %c0_14 = arith.constant 0 : index
    %c0_15 = arith.constant 0 : index
    %24 = vector.load %arg7[%c0_14, %c0_15] : memref<1x128xf32, #tpu.memory_space<vmem>>, vector<1x128xf32>
    %cst_16 = arith.constant dense<0.000000e+00> : vector<16x128xf32>
    %25 = tpu.matmul %22, %23, %cst_16 {dimension_numbers = #tpu.dot_dimension_numbers<[1], [0], [0], [1], [0, 0, 1, 1], [], []>} : vector<16x128xf32>, vector<128x128xf32>, vector<16x128xf32> -> vector<16x128xf32>
    %26 = vector.broadcast %24 : vector<1x128xf32> to vector<16x128xf32>
    %27 = arith.addf %25, %26 : vector<16x128xf32>
    %c0_17 = arith.constant 0 : index
    %c0_18 = arith.constant 0 : index
    %28 = vector.load %arg8[%c0_17, %c0_18] : memref<16x128xf32, #tpu.memory_space<vmem>>, vector<16x128xf32>
    tpu.vector_store %arg8[%c0_17, %c0_18], %27 {strides = array<i32>} : memref<16x128xf32, #tpu.memory_space<vmem>>, vector<16x128xf32>,
    return
  }
  func.func @transform_0(%arg0: i32) -> (i32, i32) {
    %c0_i32 = arith.constant 0 : i32
    %c0_i32_0 = arith.constant 0 : i32
    return %arg0, %c0_i32 : i32, i32
  }
  func.func @transform_1(%arg0: i32) -> (i32, i32) {
    %c0_i32 = arith.constant 0 : i32
    %c0_i32_0 = arith.constant 0 : i32
    %c0_i32_1 = arith.constant 0 : i32
    return %c0_i32, %c0_i32_0 : i32, i32
  }
  func.func @transform_2(%arg0: i32) -> (i32, i32) {
    %c0_i32 = arith.constant 0 : i32
    %c0_i32_0 = arith.constant 0 : i32
    %c0_i32_1 = arith.constant 0 : i32
    return %c0_i32, %c0_i32_0 : i32, i32
  }
  func.func @transform_3(%arg0: i32) -> (i32, i32) {
    %c0_i32 = arith.constant 0 : i32
    %c0_i32_0 = arith.constant 0 : i32
    %c0_i32_1 = arith.constant 0 : i32
    return %c0_i32, %c0_i32_0 : i32, i32
  }
  func.func @transform_4(%arg0: i32) -> (i32, i32) {
    %c0_i32 = arith.constant 0 : i32
    %c0_i32_0 = arith.constant 0 : i32
    %c0_i32_1 = arith.constant 0 : i32
    return %c0_i32, %c0_i32_0 : i32, i32
  }
  func.func @transform_5(%arg0: i32) -> (i32, i32) {
    %c0_i32 = arith.constant 0 : i32
    %c0_i32_0 = arith.constant 0 : i32
    %c0_i32_1 = arith.constant 0 : i32
    return %c0_i32, %c0_i32_0 : i32, i32
  }
  func.func @transform_6(%arg0: i32) -> (i32, i32) {
    %c0_i32 = arith.constant 0 : i32
    %c0_i32_0 = arith.constant 0 : i32
    %c0_i32_1 = arith.constant 0 : i32
    return %c0_i32, %c0_i32_0 : i32, i32
  }
  func.func @transform_7(%arg0: i32) -> (i32, i32) {
    %c0_i32 = arith.constant 0 : i32
    %c0_i32_0 = arith.constant 0 : i32
    return %arg0, %c0_i32 : i32, i32
  }
}

module attributes {stable_mosaic.version = 11 : i64} {
  func.func @_mlp_kernel(%arg0: i32, %arg1: memref<16x128xf32, #tpu.memory_space<vmem>>, %arg2: memref<128x128xf32, #tpu.memory_space<vmem>>, %arg3: memref<1x128xf32, #tpu.memory_space<vmem>>, %arg4: memref<128x128xf32, #tpu.memory_space<vmem>>, %arg5: memref<1x128xf32, #tpu.memory_space<vmem>>, %arg6: memref<128x128xf32, #tpu.memory_space<vmem>>, %arg7: memref<1x128xf32, #tpu.memory_space<vmem>>, %arg8: memref<16x128xf32, #tpu.memory_space<vmem>>) attributes {dimension_semantics = [#tpu.dimension_semantics<parallel>], iteration_bounds = array<i64: 1>, scalar_prefetch = 0 : i64, scratch_operands = 0 : i64, tpu.core_type = #tpu.core_type<tc>, window_params = [{transform_indices = @transform_0, window_bounds = array<i64: 16, 128>}, {pipeline_mode = #tpu.pipeline_mode<synchronous>, transform_indices = @transform_1, window_bounds = array<i64: 128, 128>}, {pipeline_mode = #tpu.pipeline_mode<synchronous>, transform_indices = @transform_2, window_bounds = array<i64: 1, 128>}, {pipeline_mode = #tpu.pipeline_mode<synchronous>, transform_indices = @transform_3, window_bounds = array<i64: 128, 128>}, {pipeline_mode = #tpu.pipeline_mode<synchronous>, transform_indices = @transform_4, window_bounds = array<i64: 1, 128>}, {pipeline_mode = #tpu.pipeline_mode<synchronous>, transform_indices = @transform_5, window_bounds = array<i64: 128, 128>}, {pipeline_mode = #tpu.pipeline_mode<synchronous>, transform_indices = @transform_6, window_bounds = array<i64: 1, 128>}, {transform_indices = @transform_7, window_bounds = array<i64: 16, 128>}]} {
    %c0 = arith.constant 0 : index
    %c0_0 = arith.constant 0 : index
    %0 = vector.load %arg1[%c0, %c0_0] : memref<16x128xf32, #tpu.memory_space<vmem>>, vector<16x128xf32>
    %c0_1 = arith.constant 0 : index
    %c0_2 = arith.constant 0 : index
    %1 = vector.load %arg2[%c0_1, %c0_2] : memref<128x128xf32, #tpu.memory_space<vmem>>, vector<128x128xf32>
    %c0_3 = arith.constant 0 : index
    %c0_4 = arith.constant 0 : index
    %2 = vector.load %arg3[%c0_3, %c0_4] : memref<1x128xf32, #tpu.memory_space<vmem>>, vector<1x128xf32>
    %cst = arith.constant dense<0.000000e+00> : vector<16x128xf32>
    %3 = tpu.matmul %0, %1, %cst {dimension_numbers = #tpu.dot_dimension_numbers<[1], [0], [0], [1], [0, 0, 1, 1], [], []>} : vector<16x128xf32>, vector<128x128xf32>, vector<16x128xf32> -> vector<16x128xf32>
    %4 = vector.broadcast %2 : vector<1x128xf32> to vector<16x128xf32>
    %5 = arith.addf %3, %4 : vector<16x128xf32>
    %6 = arith.negf %5 : vector<16x128xf32>
    %7 = math.exp %6 : vector<16x128xf32>
    %cst_5 = arith.constant 1.000000e+00 : f32
    %8 = vector.broadcast %cst_5 : f32 to vector<16x128xf32>
    %9 = arith.addf %8, %7 : vector<16x128xf32>
    %10 = arith.divf %8, %9 : vector<16x128xf32>
    %11 = arith.mulf %5, %10 : vector<16x128xf32>
    %c0_6 = arith.constant 0 : index
    %c0_7 = arith.constant 0 : index
    %12 = vector.load %arg4[%c0_6, %c0_7] : memref<128x128xf32, #tpu.memory_space<vmem>>, vector<128x128xf32>
    %c0_8 = arith.constant 0 : index
    %c0_9 = arith.constant 0 : index
    %13 = vector.load %arg5[%c0_8, %c0_9] : memref<1x128xf32, #tpu.memory_space<vmem>>, vector<1x128xf32>
    %cst_10 = arith.constant dense<0.000000e+00> : vector<16x128xf32>
    %14 = tpu.matmul %11, %12, %cst_10 {dimension_numbers = #tpu.dot_dimension_numbers<[1], [0], [0], [1], [0, 0, 1, 1], [], []>} : vector<16x128xf32>, vector<128x128xf32>, vector<16x128xf32> -> vector<16x128xf32>
    %15 = vector.broadcast %13 : vector<1x128xf32> to vector<16x128xf32>
    %16 = arith.addf %14, %15 : vector<16x128xf32>
    %17 = arith.negf %16 : vector<16x128xf32>
    %18 = math.exp %17 : vector<16x128xf32>
    %cst_11 = arith.constant 1.000000e+00 : f32
    %19 = vector.broadcast %cst_11 : f32 to vector<16x128xf32>
    %20 = arith.addf %19, %18 : vector<16x128xf32>
    %21 = arith.divf %19, %20 : vector<16x128xf32>
    %22 = arith.mulf %16, %21 : vector<16x128xf32>
    %c0_12 = arith.constant 0 : index
    %c0_13 = arith.constant 0 : index
    %23 = vector.load %arg6[%c0_12, %c0_13] : memref<128x128xf32, #tpu.memory_space<vmem>>, vector<128x128xf32>
    %c0_14 = arith.constant 0 : index
    %c0_15 = arith.constant 0 : index
    %24 = vector.load %arg7[%c0_14, %c0_15] : memref<1x128xf32, #tpu.memory_space<vmem>>, vector<1x128xf32>
    %cst_16 = arith.constant dense<0.000000e+00> : vector<16x128xf32>
    %25 = tpu.matmul %22, %23, %cst_16 {dimension_numbers = #tpu.dot_dimension_numbers<[1], [0], [0], [1], [0, 0, 1, 1], [], []>} : vector<16x128xf32>, vector<128x128xf32>, vector<16x128xf32> -> vector<16x128xf32>
    %26 = vector.broadcast %24 : vector<1x128xf32> to vector<16x128xf32>
    %27 = arith.addf %25, %26 : vector<16x128xf32>
    %c0_17 = arith.constant 0 : index
    %c0_18 = arith.constant 0 : index
    %28 = vector.load %arg8[%c0_17, %c0_18] : memref<16x128xf32, #tpu.memory_space<vmem>>, vector<16x128xf32>
    tpu.vector_store %arg8[%c0_17, %c0_18], %27 {strides = array<i32>} : memref<16x128xf32, #tpu.memory_space<vmem>>, vector<16x128xf32>,
    return
  }
  func.func @transform_0(%arg0: i32) -> (i32, i32) {
    %c0_i32 = arith.constant 0 : i32
    %c0_i32_0 = arith.constant 0 : i32
    return %arg0, %c0_i32 : i32, i32
  }
  func.func @transform_1(%arg0: i32) -> (i32, i32) {
    %c0_i32 = arith.constant 0 : i32
    %c0_i32_0 = arith.constant 0 : i32
    %c0_i32_1 = arith.constant 0 : i32
    return %c0_i32, %c0_i32_0 : i32, i32
  }
  func.func @transform_2(%arg0: i32) -> (i32, i32) {
    %c0_i32 = arith.constant 0 : i32
    %c0_i32_0 = arith.constant 0 : i32
    %c0_i32_1 = arith.constant 0 : i32
    return %c0_i32, %c0_i32_0 : i32, i32
  }
  func.func @transform_3(%arg0: i32) -> (i32, i32) {
    %c0_i32 = arith.constant 0 : i32
    %c0_i32_0 = arith.constant 0 : i32
    %c0_i32_1 = arith.constant 0 : i32
    return %c0_i32, %c0_i32_0 : i32, i32
  }
  func.func @transform_4(%arg0: i32) -> (i32, i32) {
    %c0_i32 = arith.constant 0 : i32
    %c0_i32_0 = arith.constant 0 : i32
    %c0_i32_1 = arith.constant 0 : i32
    return %c0_i32, %c0_i32_0 : i32, i32
  }
  func.func @transform_5(%arg0: i32) -> (i32, i32) {
    %c0_i32 = arith.constant 0 : i32
    %c0_i32_0 = arith.constant 0 : i32
    %c0_i32_1 = arith.constant 0 : i32
    return %c0_i32, %c0_i32_0 : i32, i32
  }
  func.func @transform_6(%arg0: i32) -> (i32, i32) {
    %c0_i32 = arith.constant 0 : i32
    %c0_i32_0 = arith.constant 0 : i32
    %c0_i32_1 = arith.constant 0 : i32
    return %c0_i32, %c0_i32_0 : i32, i32
  }
  func.func @transform_7(%arg0: i32) -> (i32, i32) {
    %c0_i32 = arith.constant 0 : i32
    %c0_i32_0 = arith.constant 0 : i32
    return %arg0, %c0_i32 : i32, i32
  }
}

</mosaic_0001>

<llo_original>
// kernel: tpu_custom_call.1
$region0: #{tpu_custom_call.1}
  #allocation0 [shape = 'u32[]', space=smem, size = 0x4, offset = 0x4, fixed_abs, tag = 'smem constant byte address 0x4 - core index']
  #allocation1 [shape = 'u32[144,128]{1,0:T(1,128)}', space=vmem, size = 0x12000, scoped, tag = 'internal scratch']
  %s0 = inlined_call_operand.hbm [shape: f32[16,128], index: 0, kind: input, shape index: {}]
  %s1 = inlined_call_operand.hbm [shape: f32[128,128], index: 1, kind: input, shape index: {}]
  %s2 = inlined_call_operand.vmem [shape: f32[1,128], index: 2, kind: input, shape index: {}]
  %s3 = inlined_call_operand.hbm [shape: f32[128,128], index: 3, kind: input, shape index: {}]
  %s4 = inlined_call_operand.vmem [shape: f32[1,128], index: 4, kind: input, shape index: {}]
  %s5 = inlined_call_operand.hbm [shape: f32[128,128], index: 5, kind: input, shape index: {}]
  %s6 = inlined_call_operand.vmem [shape: f32[1,128], index: 6, kind: input, shape index: {}]
  %s7 = inlined_call_operand.hbm [shape: f32[16,128], index: 7, kind: output, shape index: {}]
  %s8 = sld [smem:[#allocation0]]
  $region54: #{tpu_custom_call.1} parent=0
    _
  %s10 = ssub.s32 1, %s8
  %s11 = scalar_select 0, %s10, %s8
  $region1: #{tpu_custom_call.1} parent=0
    #allocation2 [shape = 'u8[8192]{0}', space=vmem, size = 0x2000, scoped, tag = 'input window, operand 0, single buffered']
    #allocation3 [shape = 's32[1]{0}', space=sflag, size = 0x4, scoped, tag = 'scoped memory for tpu_custom_call.1']
    #allocation4 [shape = 's32[1]{0}', space=sflag, size = 0x4, scoped, tag = 'scoped memory for tpu_custom_call.1']
    #allocation5 [shape = 'u8[65536]{0}', space=vmem, size = 0x10000, scoped, tag = 'input window, operand 1, single buffered']
    #allocation6 [shape = 's32[1]{0}', space=sflag, size = 0x4, scoped, tag = 'scoped memory for tpu_custom_call.1']
    #allocation7 [shape = 'u8[65536]{0}', space=vmem, size = 0x10000, scoped, tag = 'input window, operand 3, single buffered']
    #allocation8 [shape = 'u8[65536]{0}', space=vmem, size = 0x10000, scoped, tag = 'input window, operand 5, single buffered']
    #allocation9 [shape = 's32[1]{0}', space=sflag, size = 0x4, scoped, tag = 'scoped memory for tpu_custom_call.1']
    #allocation10 [shape = 'u8[8192]{0}', space=vmem, size = 0x2000, scoped, tag = 'output window, operand 0, single buffered']
    %12 = vsyncpa [#allocation3], 0
    %13 = vsyncpa [#allocation6], 0
    %14 = vsyncpa [#allocation9], 0
    %15 = vsyncpa [#allocation4], 0
    // Predicated region
    $region2: #{tpu_custom_call.1} parent=1 // pred_check
      _
    $region3: #{tpu_custom_call.1} parent=1 // pred_check_branch
      %17 = sbr.rel (0) target = $region5
    $region4: #{tpu_custom_call.1} parent=1 // pred_region
      %s19 = ssub.s32 256, 256
      %20 = vsyncadd [#allocation3], %s19
      %s21 = sshll.u32 [#allocation2], 4
      %s22 = int_to_ptr.vmem [resolvable:$true] %s21
      %27 = dma.hbm_to_vmem [thread:$0]  %s0, 256, %s22, [#allocation3], 128, 128, 8
    $region5: #{tpu_custom_call.1} parent=1 // pred_fallthru
      _
    // Predicated region
    $region6: #{tpu_custom_call.1} parent=1 // pred_check
      _
    $region7: #{tpu_custom_call.1} parent=1 // pred_check_branch
      %29 = sbr.rel (0) target = $region9
    $region8: #{tpu_custom_call.1} parent=1 // pred_region
      %s31 = ssub.s32 2048, 2048
      %32 = vsyncadd [#allocation6], %s31
      %s33 = sshll.u32 [#allocation5], 4
      %s34 = int_to_ptr.vmem [resolvable:$true] %s33
      %39 = dma.hbm_to_vmem [thread:$0]  %s1, 2048, %s34, [#allocation6], 128, 128, 8
    $region9: #{tpu_custom_call.1} parent=1 // pred_fallthru
      _
    // Predicated region
    $region10: #{tpu_custom_call.1} parent=1 // pred_check
      _
    $region11: #{tpu_custom_call.1} parent=1 // pred_check_branch
      %41 = sbr.rel (0) target = $region13
    $region12: #{tpu_custom_call.1} parent=1 // pred_region
      _
    $region13: #{tpu_custom_call.1} parent=1 // pred_fallthru
      _
    // Predicated region
    $region14: #{tpu_custom_call.1} parent=1 // pred_check
      _
    $region15: #{tpu_custom_call.1} parent=1 // pred_check_branch
      %43 = sbr.rel (0) target = $region17
    $region16: #{tpu_custom_call.1} parent=1 // pred_region
      %s45 = ssub.s32 2048, 2048
      %46 = vsyncadd [#allocation6], %s45
      %s47 = sshll.u32 [#allocation7], 4
      %s48 = int_to_ptr.vmem [resolvable:$true] %s47
      %53 = dma.hbm_to_vmem [thread:$0]  %s3, 2048, %s48, [#allocation6], 128, 128, 8
    $region17: #{tpu_custom_call.1} parent=1 // pred_fallthru
      _
    // Predicated region
    $region18: #{tpu_custom_call.1} parent=1 // pred_check
      _
    $region19: #{tpu_custom_call.1} parent=1 // pred_check_branch
      %55 = sbr.rel (0) target = $region21
    $region20: #{tpu_custom_call.1} parent=1 // pred_region
      _
    $region21: #{tpu_custom_call.1} parent=1 // pred_fallthru
      _
    // Predicated region
    $region22: #{tpu_custom_call.1} parent=1 // pred_check
      _
    $region23: #{tpu_custom_call.1} parent=1 // pred_check_branch
      %57 = sbr.rel (0) target = $region25
    $region24: #{tpu_custom_call.1} parent=1 // pred_region
      %s59 = ssub.s32 2048, 2048
      %60 = vsyncadd [#allocation9], %s59
      %s61 = sshll.u32 [#allocation8], 4
      %s62 = int_to_ptr.vmem [resolvable:$true] %s61
      %67 = dma.hbm_to_vmem [thread:$0]  %s5, 2048, %s62, [#allocation9], 128, 128, 8
    $region25: #{tpu_custom_call.1} parent=1 // pred_fallthru
      _
    // Predicated region
    $region26: #{tpu_custom_call.1} parent=1 // pred_check
      _
    $region27: #{tpu_custom_call.1} parent=1 // pred_check_branch
      %69 = sbr.rel (0) target = $region29
    $region28: #{tpu_custom_call.1} parent=1 // pred_region
      _
    $region29: #{tpu_custom_call.1} parent=1 // pred_fallthru
      _
    // Predicated region
    $region30: #{tpu_custom_call.1} parent=1 // pred_check
      _
    $region31: #{tpu_custom_call.1} parent=1 // pred_check_branch
      %71 = sbr.rel (0) target = $region33
    $region32: #{tpu_custom_call.1} parent=1 // pred_region
      %72 = dma.done [#allocation3], 256
    $region33: #{tpu_custom_call.1} parent=1 // pred_fallthru
      _
    // Predicated region
    $region34: #{tpu_custom_call.1} parent=1 // pred_check
      _
    $region35: #{tpu_custom_call.1} parent=1 // pred_check_branch
      %74 = sbr.rel (0) target = $region37
    $region36: #{tpu_custom_call.1} parent=1 // pred_region
      %75 = dma.done [#allocation6], 2048
    $region37: #{tpu_custom_call.1} parent=1 // pred_fallthru
      _
    // Predicated region
    $region38: #{tpu_custom_call.1} parent=1 // pred_check
      _
    $region39: #{tpu_custom_call.1} parent=1 // pred_check_branch
      %77 = sbr.rel (0) target = $region41
    $region40: #{tpu_custom_call.1} parent=1 // pred_region
      %78 = dma.done [#allocation6], 2048
    $region41: #{tpu_custom_call.1} parent=1 // pred_fallthru
      _
    // Predicated region
    $region42: #{tpu_custom_call.1} parent=1 // pred_check
      _
    $region43: #{tpu_custom_call.1} parent=1 // pred_check_branch
      %80 = sbr.rel (0) target = $region45
    $region44: #{tpu_custom_call.1} parent=1 // pred_region
      %81 = dma.done [#allocation9], 2048
    $region45: #{tpu_custom_call.1} parent=1 // pred_fallthru
      _
    %v82 = vld [vmem:[#allocation2] sm:$0xff]
    %v83 = vld [vmem:[#allocation2 + $0x8] sm:$0xff]
    %v84 = vld [vmem:[#allocation5] sm:$0xff]
    %v85 = vld [vmem:[#allocation5 + $0x8] sm:$0xff]
    %v86 = vld [vmem:[#allocation5 + $0x10] sm:$0xff]
    %v87 = vld [vmem:[#allocation5 + $0x18] sm:$0xff]
    %v88 = vld [vmem:[#allocation5 + $0x20] sm:$0xff]
    %v89 = vld [vmem:[#allocation5 + $0x28] sm:$0xff]
    %v90 = vld [vmem:[#allocation5 + $0x30] sm:$0xff]
    %v91 = vld [vmem:[#allocation5 + $0x38] sm:$0xff]
    %v92 = vld [vmem:[#allocation5 + $0x40] sm:$0xff]
    %v93 = vld [vmem:[#allocation5 + $0x48] sm:$0xff]
    %v94 = vld [vmem:[#allocation5 + $0x50] sm:$0xff]
    %v95 = vld [vmem:[#allocation5 + $0x58] sm:$0xff]
    %v96 = vld [vmem:[#allocation5 + $0x60] sm:$0xff]
    %v97 = vld [vmem:[#allocation5 + $0x68] sm:$0xff]
    %v98 = vld [vmem:[#allocation5 + $0x70] sm:$0xff]
    %v99 = vld [vmem:[#allocation5 + $0x78] sm:$0xff]
    %v100 = vld [vmem:[%s2] sm:$0x1]
    %v102 = vlaneseq
    %v103 = vshrl.u32 %v102, 7
    %v104 = vsub.s32 0, %v103
    %v105 = vrot.slane %v100, %v104
    %107 = vmatprep.subr.mxu0 0.0
    %108 = vmatpush1.msra.mxu0 %v84
    %109 = vmatprep.subr.mxu0 0.0
    %110 = vmatpush1.msra.mxu0 %v85
    %111 = vmatprep.subr.mxu0 0.0
    %112 = vmatpush1.msra.mxu0 %v86
    %113 = vmatprep.subr.mxu0 0.0
    %114 = vmatpush1.msra.mxu0 %v87
    %115 = vmatprep.subr.mxu0 0.0
    %116 = vmatpush1.msra.mxu0 %v88
    %117 = vmatprep.subr.mxu0 0.0
    %118 = vmatpush1.msra.mxu0 %v89
    %119 = vmatprep.subr.mxu0 0.0
    %120 = vmatpush1.msra.mxu0 %v90
    %121 = vmatprep.subr.mxu0 0.0
    %122 = vmatpush1.msra.mxu0 %v91
    %123 = vmatprep.subr.mxu0 0.0
    %124 = vmatpush1.msra.mxu0 %v92
    %125 = vmatprep.subr.mxu0 0.0
    %126 = vmatpush1.msra.mxu0 %v93
    %127 = vmatprep.subr.mxu0 0.0
    %128 = vmatpush1.msra.mxu0 %v94
    %129 = vmatprep.subr.mxu0 0.0
    %130 = vmatpush1.msra.mxu0 %v95
    %131 = vmatprep.subr.mxu0 0.0
    %132 = vmatpush1.msra.mxu0 %v96
    %133 = vmatprep.subr.mxu0 0.0
    %134 = vmatpush1.msra.mxu0 %v97
    %135 = vmatprep.subr.mxu0 0.0
    %136 = vmatpush1.msra.mxu0 %v98
    %137 = vmatprep.subr.mxu0 0.0
    %138 = vmatpush1.msra.mxu0 %v99
    %139 = vmatprep.subr.mxu0 0.0
    %140 = vmatpush1.msra.mxu0 0.0
    %141 = vmatprep.subr.mxu0 0.0
    %142 = vmatpush1.msra.mxu0 0.0
    %143 = vmatprep.subr.mxu0 0.0
    %144 = vmatpush1.msra.mxu0 0.0
    %145 = vmatprep.subr.mxu0 0.0
    %146 = vmatpush1.msra.mxu0 0.0
    %147 = vmatprep.subr.mxu0 0.0
    %148 = vmatpush1.msra.mxu0 0.0
    %149 = vmatprep.subr.mxu0 0.0
    %150 = vmatpush1.msra.mxu0 0.0
    %151 = vmatprep.subr.mxu0 0.0
    %152 = vmatpush1.msra.mxu0 0.0
    %153 = vmatprep.subr.mxu0 0.0
    %154 = vmatpush1.msra.mxu0 0.0
    %155 = vmatprep.subr.mxu0 0.0
    %156 = vmatpush1.msra.mxu0 0.0
    %157 = vmatprep.subr.mxu0 0.0
    %158 = vmatpush1.msra.mxu0 0.0
    %159 = vmatprep.subr.mxu0 0.0
    %160 = vmatpush1.msra.mxu0 0.0
    %161 = vmatprep.subr.mxu0 0.0
    %162 = vmatpush1.msra.mxu0 0.0
    %163 = vmatprep.subr.mxu0 0.0
    %164 = vmatpush1.msra.mxu0 0.0
    %165 = vmatprep.subr.mxu0 0.0
    %166 = vmatpush1.msra.mxu0 0.0
    %167 = vmatprep.subr.mxu0 0.0
    %168 = vmatpush1.msra.mxu0 0.0
    %169 = vmatprep.subr.mxu0 0.0
    %170 = vmatpush1.msra.mxu0 0.0
    %171 = vmatprep.mubr.f32.mxu0 0.0
    %172 = vmatmul.mubr.f32.gmra.mrb[0].mxu0 %v82
    %v173 = vpop.f32.mrb[0].mxu0
    %v174 = vadd.f32 %v105, %v173
    %v175 = vpop.f32.mrb[0].mxu0
    %176 = vmatprep.mubr.f32.mxu0 0.0
    %177 = vmatmul.mubr.f32.gmra.mrb[0].mxu0 %v83
    %v178 = vpop.f32.mrb[0].mxu0
    %v179 = vadd.f32 %v105, %v178
    %v180 = vpop.f32.mrb[0].mxu0
    %181 = vdwg.mxu0
    %v182 = vxor.u32 %v174, 2147483648
    %v183 = vxor.u32 %v179, 2147483648
    %v184 = vmul.f32 %v182, 1.442695
    %v185 = vpow.pop %v184
    %v186 = vmul.f32 %v183, 1.442695
    %v187 = vpow.pop %v186
    %v188 = vadd.f32 %v185, 1.0
    %v189 = vadd.f32 %v187, 1.0
    %v190 = vrcp.pop %v188
    %v191 = vmul.f32 1.0, %v190
    %v192 = vrcp.pop %v189
    %v193 = vmul.f32 1.0, %v192
    %v194 = vmul.f32 %v174, %v191
    %v195 = vmul.f32 %v179, %v193
    %v196 = vld [vmem:[#allocation7] sm:$0xff]
    %v197 = vld [vmem:[#allocation7 + $0x8] sm:$0xff]
    %v198 = vld [vmem:[#allocation7 + $0x10] sm:$0xff]
    %v199 = vld [vmem:[#allocation7 + $0x18] sm:$0xff]
    %v200 = vld [vmem:[#allocation7 + $0x20] sm:$0xff]
    %v201 = vld [vmem:[#allocation7 + $0x28] sm:$0xff]
    %v202 = vld [vmem:[#allocation7 + $0x30] sm:$0xff]
    %v203 = vld [vmem:[#allocation7 + $0x38] sm:$0xff]
    %v204 = vld [vmem:[#allocation7 + $0x40] sm:$0xff]
    %v205 = vld [vmem:[#allocation7 + $0x48] sm:$0xff]
    %v206 = vld [vmem:[#allocation7 + $0x50] sm:$0xff]
    %v207 = vld [vmem:[#allocation7 + $0x58] sm:$0xff]
    %v208 = vld [vmem:[#allocation7 + $0x60] sm:$0xff]
    %v209 = vld [vmem:[#allocation7 + $0x68] sm:$0xff]
    %v210 = vld [vmem:[#allocation7 + $0x70] sm:$0xff]
    %v211 = vld [vmem:[#allocation7 + $0x78] sm:$0xff]
    %v212 = vld [vmem:[%s4] sm:$0x1]
    %v214 = vlaneseq
    %v215 = vshrl.u32 %v214, 7
    %v216 = vsub.s32 0, %v215
    %v217 = vrot.slane %v212, %v216
    %219 = vmatprep.subr.mxu0 0.0
    %220 = vmatpush1.msra.mxu0 %v196
    %221 = vmatprep.subr.mxu0 0.0
    %222 = vmatpush1.msra.mxu0 %v197
    %223 = vmatprep.subr.mxu0 0.0
    %224 = vmatpush1.msra.mxu0 %v198
    %225 = vmatprep.subr.mxu0 0.0
    %226 = vmatpush1.msra.mxu0 %v199
    %227 = vmatprep.subr.mxu0 0.0
    %228 = vmatpush1.msra.mxu0 %v200
    %229 = vmatprep.subr.mxu0 0.0
    %230 = vmatpush1.msra.mxu0 %v201
    %231 = vmatprep.subr.mxu0 0.0
    %232 = vmatpush1.msra.mxu0 %v202
    %233 = vmatprep.subr.mxu0 0.0
    %234 = vmatpush1.msra.mxu0 %v203
    %235 = vmatprep.subr.mxu0 0.0
    %236 = vmatpush1.msra.mxu0 %v204
    %237 = vmatprep.subr.mxu0 0.0
    %238 = vmatpush1.msra.mxu0 %v205
    %239 = vmatprep.subr.mxu0 0.0
    %240 = vmatpush1.msra.mxu0 %v206
    %241 = vmatprep.subr.mxu0 0.0
    %242 = vmatpush1.msra.mxu0 %v207
    %243 = vmatprep.subr.mxu0 0.0
    %244 = vmatpush1.msra.mxu0 %v208
    %245 = vmatprep.subr.mxu0 0.0
    %246 = vmatpush1.msra.mxu0 %v209
    %247 = vmatprep.subr.mxu0 0.0
    %248 = vmatpush1.msra.mxu0 %v210
    %249 = vmatprep.subr.mxu0 0.0
    %250 = vmatpush1.msra.mxu0 %v211
    %251 = vmatprep.subr.mxu0 0.0
    %252 = vmatpush1.msra.mxu0 0.0
    %253 = vmatprep.subr.mxu0 0.0
    %254 = vmatpush1.msra.mxu0 0.0
    %255 = vmatprep.subr.mxu0 0.0
    %256 = vmatpush1.msra.mxu0 0.0
    %257 = vmatprep.subr.mxu0 0.0
    %258 = vmatpush1.msra.mxu0 0.0
    %259 = vmatprep.subr.mxu0 0.0
    %260 = vmatpush1.msra.mxu0 0.0
    %261 = vmatprep.subr.mxu0 0.0
    %262 = vmatpush1.msra.mxu0 0.0
    %263 = vmatprep.subr.mxu0 0.0
    %264 = vmatpush1.msra.mxu0 0.0
    %265 = vmatprep.subr.mxu0 0.0
    %266 = vmatpush1.msra.mxu0 0.0
    %267 = vmatprep.subr.mxu0 0.0
    %268 = vmatpush1.msra.mxu0 0.0
    %269 = vmatprep.subr.mxu0 0.0
    %270 = vmatpush1.msra.mxu0 0.0
    %271 = vmatprep.subr.mxu0 0.0
    %272 = vmatpush1.msra.mxu0 0.0
    %273 = vmatprep.subr.mxu0 0.0
    %274 = vmatpush1.msra.mxu0 0.0
    %275 = vmatprep.subr.mxu0 0.0
    %276 = vmatpush1.msra.mxu0 0.0
    %277 = vmatprep.subr.mxu0 0.0
    %278 = vmatpush1.msra.mxu0 0.0
    %279 = vmatprep.subr.mxu0 0.0
    %280 = vmatpush1.msra.mxu0 0.0
    %281 = vmatprep.subr.mxu0 0.0
    %282 = vmatpush1.msra.mxu0 0.0
    %283 = vmatprep.mubr.f32.mxu0 0.0
    %284 = vmatmul.mubr.f32.gmra.mrb[0].mxu0 %v194
    %v285 = vpop.f32.mrb[0].mxu0
    %v286 = vadd.f32 %v217, %v285
    %v287 = vpop.f32.mrb[0].mxu0
    %288 = vmatprep.mubr.f32.mxu0 0.0
    %289 = vmatmul.mubr.f32.gmra.mrb[0].mxu0 %v195
    %v290 = vpop.f32.mrb[0].mxu0
    %v291 = vadd.f32 %v217, %v290
    %v292 = vpop.f32.mrb[0].mxu0
    %293 = vdwg.mxu0
    %v294 = vxor.u32 %v286, 2147483648
    %v295 = vxor.u32 %v291, 2147483648
    %v296 = vmul.f32 %v294, 1.442695
    %v297 = vpow.pop %v296
    %v298 = vmul.f32 %v295, 1.442695
    %v299 = vpow.pop %v298
    %v300 = vadd.f32 %v297, 1.0
    %v301 = vadd.f32 %v299, 1.0
    %v302 = vrcp.pop %v300
    %v303 = vmul.f32 1.0, %v302
    %v304 = vrcp.pop %v301
    %v305 = vmul.f32 1.0, %v304
    %v306 = vmul.f32 %v286, %v303
    %v307 = vmul.f32 %v291, %v305
    %v308 = vld [vmem:[#allocation8] sm:$0xff]
    %v309 = vld [vmem:[#allocation8 + $0x8] sm:$0xff]
    %v310 = vld [vmem:[#allocation8 + $0x10] sm:$0xff]
    %v311 = vld [vmem:[#allocation8 + $0x18] sm:$0xff]
    %v312 = vld [vmem:[#allocation8 + $0x20] sm:$0xff]
    %v313 = vld [vmem:[#allocation8 + $0x28] sm:$0xff]
    %v314 = vld [vmem:[#allocation8 + $0x30] sm:$0xff]
    %v315 = vld [vmem:[#allocation8 + $0x38] sm:$0xff]
    %v316 = vld [vmem:[#allocation8 + $0x40] sm:$0xff]
    %v317 = vld [vmem:[#allocation8 + $0x48] sm:$0xff]
    %v318 = vld [vmem:[#allocation8 + $0x50] sm:$0xff]
    %v319 = vld [vmem:[#allocation8 + $0x58] sm:$0xff]
    %v320 = vld [vmem:[#allocation8 + $0x60] sm:$0xff]
    %v321 = vld [vmem:[#allocation8 + $0x68] sm:$0xff]
    %v322 = vld [vmem:[#allocation8 + $0x70] sm:$0xff]
    %v323 = vld [vmem:[#allocation8 + $0x78] sm:$0xff]
    %v324 = vld [vmem:[%s6] sm:$0x1]
    %v326 = vlaneseq
    %v327 = vshrl.u32 %v326, 7
    %v328 = vsub.s32 0, %v327
    %v329 = vrot.slane %v324, %v328
    %331 = vmatprep.subr.mxu0 0.0
    %332 = vmatpush1.msra.mxu0 %v308
    %333 = vmatprep.subr.mxu0 0.0
    %334 = vmatpush1.msra.mxu0 %v309
    %335 = vmatprep.subr.mxu0 0.0
    %336 = vmatpush1.msra.mxu0 %v310
    %337 = vmatprep.subr.mxu0 0.0
    %338 = vmatpush1.msra.mxu0 %v311
    %339 = vmatprep.subr.mxu0 0.0
    %340 = vmatpush1.msra.mxu0 %v312
    %341 = vmatprep.subr.mxu0 0.0
    %342 = vmatpush1.msra.mxu0 %v313
    %343 = vmatprep.subr.mxu0 0.0
    %344 = vmatpush1.msra.mxu0 %v314
    %345 = vmatprep.subr.mxu0 0.0
    %346 = vmatpush1.msra.mxu0 %v315
    %347 = vmatprep.subr.mxu0 0.0
    %348 = vmatpush1.msra.mxu0 %v316
    %349 = vmatprep.subr.mxu0 0.0
    %350 = vmatpush1.msra.mxu0 %v317
    %351 = vmatprep.subr.mxu0 0.0
    %352 = vmatpush1.msra.mxu0 %v318
    %353 = vmatprep.subr.mxu0 0.0
    %354 = vmatpush1.msra.mxu0 %v319
    %355 = vmatprep.subr.mxu0 0.0
    %356 = vmatpush1.msra.mxu0 %v320
    %357 = vmatprep.subr.mxu0 0.0
    %358 = vmatpush1.msra.mxu0 %v321
    %359 = vmatprep.subr.mxu0 0.0
    %360 = vmatpush1.msra.mxu0 %v322
    %361 = vmatprep.subr.mxu0 0.0
    %362 = vmatpush1.msra.mxu0 %v323
    %363 = vmatprep.subr.mxu0 0.0
    %364 = vmatpush1.msra.mxu0 0.0
    %365 = vmatprep.subr.mxu0 0.0
    %366 = vmatpush1.msra.mxu0 0.0
    %367 = vmatprep.subr.mxu0 0.0
    %368 = vmatpush1.msra.mxu0 0.0
    %369 = vmatprep.subr.mxu0 0.0
    %370 = vmatpush1.msra.mxu0 0.0
    %371 = vmatprep.subr.mxu0 0.0
    %372 = vmatpush1.msra.mxu0 0.0
    %373 = vmatprep.subr.mxu0 0.0
    %374 = vmatpush1.msra.mxu0 0.0
    %375 = vmatprep.subr.mxu0 0.0
    %376 = vmatpush1.msra.mxu0 0.0
    %377 = vmatprep.subr.mxu0 0.0
    %378 = vmatpush1.msra.mxu0 0.0
    %379 = vmatprep.subr.mxu0 0.0
    %380 = vmatpush1.msra.mxu0 0.0
    %381 = vmatprep.subr.mxu0 0.0
    %382 = vmatpush1.msra.mxu0 0.0
    %383 = vmatprep.subr.mxu0 0.0
    %384 = vmatpush1.msra.mxu0 0.0
    %385 = vmatprep.subr.mxu0 0.0
    %386 = vmatpush1.msra.mxu0 0.0
    %387 = vmatprep.subr.mxu0 0.0
    %388 = vmatpush1.msra.mxu0 0.0
    %389 = vmatprep.subr.mxu0 0.0
    %390 = vmatpush1.msra.mxu0 0.0
    %391 = vmatprep.subr.mxu0 0.0
    %392 = vmatpush1.msra.mxu0 0.0
    %393 = vmatprep.subr.mxu0 0.0
    %394 = vmatpush1.msra.mxu0 0.0
    %395 = vmatprep.mubr.f32.mxu0 0.0
    %396 = vmatmul.mubr.f32.gmra.mrb[0].mxu0 %v306
    %v397 = vpop.f32.mrb[0].mxu0
    %v398 = vadd.f32 %v329, %v397
    %v399 = vpop.f32.mrb[0].mxu0
    %400 = vmatprep.mubr.f32.mxu0 0.0
    %401 = vmatmul.mubr.f32.gmra.mrb[0].mxu0 %v307
    %v402 = vpop.f32.mrb[0].mxu0
    %v403 = vadd.f32 %v329, %v402
    %v404 = vpop.f32.mrb[0].mxu0
    %405 = vdwg.mxu0
    %406 = vst [vmem:[#allocation10] sm:$0xff] %v398
    %407 = vst [vmem:[#allocation10 + $0x8] sm:$0xff] %v403
    // Predicated region
    $region46: #{tpu_custom_call.1} parent=1 // pred_check
      _
    $region47: #{tpu_custom_call.1} parent=1 // pred_check_branch
      %409 = sbr.rel (0) target = $region49
    $region48: #{tpu_custom_call.1} parent=1 // pred_region
      %s411 = ssub.s32 256, 256
      %412 = vsyncadd [#allocation4], %s411
      %s413 = sshll.u32 [#allocation10], 4
      %s414 = int_to_ptr.vmem [resolvable:$true] %s413
      %419 = dma.vmem_to_hbm [thread:$0]  %s414, 256, %s7, [#allocation4], 128, 128, 8
    $region49: #{tpu_custom_call.1} parent=1 // pred_fallthru
      _
    // Predicated region
    $region50: #{tpu_custom_call.1} parent=1 // pred_check
      _
    $region51: #{tpu_custom_call.1} parent=1 // pred_check_branch
      %421 = sbr.rel (0) target = $region53
    $region52: #{tpu_custom_call.1} parent=1 // pred_region
      %422 = dma.done [#allocation4], 256
    $region53: #{tpu_custom_call.1} parent=1 // pred_fallthru
      _
    %423 = vsyncpa [#allocation3], 1
    %424 = vsyncpa [#allocation6], 1
    %425 = vsyncpa [#allocation9], 1
    %426 = vsyncpa [#allocation4], 1

// kernel: tpu_custom_call.1
$region0: #{tpu_custom_call.1}
  #allocation0 [shape = 'u32[]', space=smem, size = 0x4, offset = 0x4, fixed_abs, tag = 'smem constant byte address 0x4 - core index']
  #allocation1 [shape = 'u32[144,128]{1,0:T(1,128)}', space=vmem, size = 0x12000, scoped, tag = 'internal scratch']
  %s0 = inlined_call_operand.hbm [shape: f32[16,128], index: 0, kind: input, shape index: {}]
  %s1 = inlined_call_operand.hbm [shape: f32[128,128], index: 1, kind: input, shape index: {}]
  %s2 = inlined_call_operand.vmem [shape: f32[1,128], index: 2, kind: input, shape index: {}]
  %s3 = inlined_call_operand.hbm [shape: f32[128,128], index: 3, kind: input, shape index: {}]
  %s4 = inlined_call_operand.vmem [shape: f32[1,128], index: 4, kind: input, shape index: {}]
  %s5 = inlined_call_operand.hbm [shape: f32[128,128], index: 5, kind: input, shape index: {}]
  %s6 = inlined_call_operand.vmem [shape: f32[1,128], index: 6, kind: input, shape index: {}]
  %s7 = inlined_call_operand.hbm [shape: f32[16,128], index: 7, kind: output, shape index: {}]
  %s8 = sld [smem:[#allocation0]]
  $region54: #{tpu_custom_call.1} parent=0
    _
  %s10 = ssub.s32 1, %s8
  %s11 = scalar_select 0, %s10, %s8
  $region1: #{tpu_custom_call.1} parent=0
    #allocation2 [shape = 'u8[8192]{0}', space=vmem, size = 0x2000, scoped, tag = 'input window, operand 0, single buffered']
    #allocation3 [shape = 's32[1]{0}', space=sflag, size = 0x4, scoped, tag = 'scoped memory for tpu_custom_call.1']
    #allocation4 [shape = 's32[1]{0}', space=sflag, size = 0x4, scoped, tag = 'scoped memory for tpu_custom_call.1']
    #allocation5 [shape = 'u8[65536]{0}', space=vmem, size = 0x10000, scoped, tag = 'input window, operand 1, single buffered']
    #allocation6 [shape = 's32[1]{0}', space=sflag, size = 0x4, scoped, tag = 'scoped memory for tpu_custom_call.1']
    #allocation7 [shape = 'u8[65536]{0}', space=vmem, size = 0x10000, scoped, tag = 'input window, operand 3, single buffered']
    #allocation8 [shape = 'u8[65536]{0}', space=vmem, size = 0x10000, scoped, tag = 'input window, operand 5, single buffered']
    #allocation9 [shape = 's32[1]{0}', space=sflag, size = 0x4, scoped, tag = 'scoped memory for tpu_custom_call.1']
    #allocation10 [shape = 'u8[8192]{0}', space=vmem, size = 0x2000, scoped, tag = 'output window, operand 0, single buffered']
    %12 = vsyncpa [#allocation3], 0
    %13 = vsyncpa [#allocation6], 0
    %14 = vsyncpa [#allocation9], 0
    %15 = vsyncpa [#allocation4], 0
    // Predicated region
    $region2: #{tpu_custom_call.1} parent=1 // pred_check
      _
    $region3: #{tpu_custom_call.1} parent=1 // pred_check_branch
      %17 = sbr.rel (0) target = $region5
    $region4: #{tpu_custom_call.1} parent=1 // pred_region
      %s19 = ssub.s32 256, 256
      %20 = vsyncadd [#allocation3], %s19
      %s21 = sshll.u32 [#allocation2], 4
      %s22 = int_to_ptr.vmem [resolvable:$true] %s21
      %27 = dma.hbm_to_vmem [thread:$0]  %s0, 256, %s22, [#allocation3], 128, 128, 8
    $region5: #{tpu_custom_call.1} parent=1 // pred_fallthru
      _
    // Predicated region
    $region6: #{tpu_custom_call.1} parent=1 // pred_check
      _
    $region7: #{tpu_custom_call.1} parent=1 // pred_check_branch
      %29 = sbr.rel (0) target = $region9
    $region8: #{tpu_custom_call.1} parent=1 // pred_region
      %s31 = ssub.s32 2048, 2048
      %32 = vsyncadd [#allocation6], %s31
      %s33 = sshll.u32 [#allocation5], 4
      %s34 = int_to_ptr.vmem [resolvable:$true] %s33
      %39 = dma.hbm_to_vmem [thread:$0]  %s1, 2048, %s34, [#allocation6], 128, 128, 8
    $region9: #{tpu_custom_call.1} parent=1 // pred_fallthru
      _
    // Predicated region
    $region10: #{tpu_custom_call.1} parent=1 // pred_check
      _
    $region11: #{tpu_custom_call.1} parent=1 // pred_check_branch
      %41 = sbr.rel (0) target = $region13
    $region12: #{tpu_custom_call.1} parent=1 // pred_region
      _
    $region13: #{tpu_custom_call.1} parent=1 // pred_fallthru
      _
    // Predicated region
    $region14: #{tpu_custom_call.1} parent=1 // pred_check
      _
    $region15: #{tpu_custom_call.1} parent=1 // pred_check_branch
      %43 = sbr.rel (0) target = $region17
    $region16: #{tpu_custom_call.1} parent=1 // pred_region
      %s45 = ssub.s32 2048, 2048
      %46 = vsyncadd [#allocation6], %s45
      %s47 = sshll.u32 [#allocation7], 4
      %s48 = int_to_ptr.vmem [resolvable:$true] %s47
      %53 = dma.hbm_to_vmem [thread:$0]  %s3, 2048, %s48, [#allocation6], 128, 128, 8
    $region17: #{tpu_custom_call.1} parent=1 // pred_fallthru
      _
    // Predicated region
    $region18: #{tpu_custom_call.1} parent=1 // pred_check
      _
    $region19: #{tpu_custom_call.1} parent=1 // pred_check_branch
      %55 = sbr.rel (0) target = $region21
    $region20: #{tpu_custom_call.1} parent=1 // pred_region
      _
    $region21: #{tpu_custom_call.1} parent=1 // pred_fallthru
      _
    // Predicated region
    $region22: #{tpu_custom_call.1} parent=1 // pred_check
      _
    $region23: #{tpu_custom_call.1} parent=1 // pred_check_branch
      %57 = sbr.rel (0) target = $region25
    $region24: #{tpu_custom_call.1} parent=1 // pred_region
      %s59 = ssub.s32 2048, 2048
      %60 = vsyncadd [#allocation9], %s59
      %s61 = sshll.u32 [#allocation8], 4
      %s62 = int_to_ptr.vmem [resolvable:$true] %s61
      %67 = dma.hbm_to_vmem [thread:$0]  %s5, 2048, %s62, [#allocation9], 128, 128, 8
    $region25: #{tpu_custom_call.1} parent=1 // pred_fallthru
      _
    // Predicated region
    $region26: #{tpu_custom_call.1} parent=1 // pred_check
      _
    $region27: #{tpu_custom_call.1} parent=1 // pred_check_branch
      %69 = sbr.rel (0) target = $region29
    $region28: #{tpu_custom_call.1} parent=1 // pred_region
      _
    $region29: #{tpu_custom_call.1} parent=1 // pred_fallthru
      _
    // Predicated region
    $region30: #{tpu_custom_call.1} parent=1 // pred_check
      _
    $region31: #{tpu_custom_call.1} parent=1 // pred_check_branch
      %71 = sbr.rel (0) target = $region33
    $region32: #{tpu_custom_call.1} parent=1 // pred_region
      %72 = dma.done [#allocation3], 256
    $region33: #{tpu_custom_call.1} parent=1 // pred_fallthru
      _
    // Predicated region
    $region34: #{tpu_custom_call.1} parent=1 // pred_check
      _
    $region35: #{tpu_custom_call.1} parent=1 // pred_check_branch
      %74 = sbr.rel (0) target = $region37
    $region36: #{tpu_custom_call.1} parent=1 // pred_region
      %75 = dma.done [#allocation6], 2048
    $region37: #{tpu_custom_call.1} parent=1 // pred_fallthru
      _
    // Predicated region
    $region38: #{tpu_custom_call.1} parent=1 // pred_check
      _
    $region39: #{tpu_custom_call.1} parent=1 // pred_check_branch
      %77 = sbr.rel (0) target = $region41
    $region40: #{tpu_custom_call.1} parent=1 // pred_region
      %78 = dma.done [#allocation6], 2048
    $region41: #{tpu_custom_call.1} parent=1 // pred_fallthru
      _
    // Predicated region
    $region42: #{tpu_custom_call.1} parent=1 // pred_check
      _
    $region43: #{tpu_custom_call.1} parent=1 // pred_check_branch
      %80 = sbr.rel (0) target = $region45
    $region44: #{tpu_custom_call.1} parent=1 // pred_region
      %81 = dma.done [#allocation9], 2048
    $region45: #{tpu_custom_call.1} parent=1 // pred_fallthru
      _
    %v82 = vld [vmem:[#allocation2] sm:$0xff]
    %v83 = vld [vmem:[#allocation2 + $0x8] sm:$0xff]
    %v84 = vld [vmem:[#allocation5] sm:$0xff]
    %v85 = vld [vmem:[#allocation5 + $0x8] sm:$0xff]
    %v86 = vld [vmem:[#allocation5 + $0x10] sm:$0xff]
    %v87 = vld [vmem:[#allocation5 + $0x18] sm:$0xff]
    %v88 = vld [vmem:[#allocation5 + $0x20] sm:$0xff]
    %v89 = vld [vmem:[#allocation5 + $0x28] sm:$0xff]
    %v90 = vld [vmem:[#allocation5 + $0x30] sm:$0xff]
    %v91 = vld [vmem:[#allocation5 + $0x38] sm:$0xff]
    %v92 = vld [vmem:[#allocation5 + $0x40] sm:$0xff]
    %v93 = vld [vmem:[#allocation5 + $0x48] sm:$0xff]
    %v94 = vld [vmem:[#allocation5 + $0x50] sm:$0xff]
    %v95 = vld [vmem:[#allocation5 + $0x58] sm:$0xff]
    %v96 = vld [vmem:[#allocation5 + $0x60] sm:$0xff]
    %v97 = vld [vmem:[#allocation5 + $0x68] sm:$0xff]
    %v98 = vld [vmem:[#allocation5 + $0x70] sm:$0xff]
    %v99 = vld [vmem:[#allocation5 + $0x78] sm:$0xff]
    %v100 = vld [vmem:[%s2] sm:$0x1]
    %v102 = vlaneseq
    %v103 = vshrl.u32 %v102, 7
    %v104 = vsub.s32 0, %v103
    %v105 = vrot.slane %v100, %v104
    %107 = vmatprep.subr.mxu0 0.0
    %108 = vmatpush1.msra.mxu0 %v84
    %109 = vmatprep.subr.mxu0 0.0
    %110 = vmatpush1.msra.mxu0 %v85
    %111 = vmatprep.subr.mxu0 0.0
    %112 = vmatpush1.msra.mxu0 %v86
    %113 = vmatprep.subr.mxu0 0.0
    %114 = vmatpush1.msra.mxu0 %v87
    %115 = vmatprep.subr.mxu0 0.0
    %116 = vmatpush1.msra.mxu0 %v88
    %117 = vmatprep.subr.mxu0 0.0
    %118 = vmatpush1.msra.mxu0 %v89
    %119 = vmatprep.subr.mxu0 0.0
    %120 = vmatpush1.msra.mxu0 %v90
    %121 = vmatprep.subr.mxu0 0.0
    %122 = vmatpush1.msra.mxu0 %v91
    %123 = vmatprep.subr.mxu0 0.0
    %124 = vmatpush1.msra.mxu0 %v92
    %125 = vmatprep.subr.mxu0 0.0
    %126 = vmatpush1.msra.mxu0 %v93
    %127 = vmatprep.subr.mxu0 0.0
    %128 = vmatpush1.msra.mxu0 %v94
    %129 = vmatprep.subr.mxu0 0.0
    %130 = vmatpush1.msra.mxu0 %v95
    %131 = vmatprep.subr.mxu0 0.0
    %132 = vmatpush1.msra.mxu0 %v96
    %133 = vmatprep.subr.mxu0 0.0
    %134 = vmatpush1.msra.mxu0 %v97
    %135 = vmatprep.subr.mxu0 0.0
    %136 = vmatpush1.msra.mxu0 %v98
    %137 = vmatprep.subr.mxu0 0.0
    %138 = vmatpush1.msra.mxu0 %v99
    %139 = vmatprep.subr.mxu0 0.0
    %140 = vmatpush1.msra.mxu0 0.0
    %141 = vmatprep.subr.mxu0 0.0
    %142 = vmatpush1.msra.mxu0 0.0
    %143 = vmatprep.subr.mxu0 0.0
    %144 = vmatpush1.msra.mxu0 0.0
    %145 = vmatprep.subr.mxu0 0.0
    %146 = vmatpush1.msra.mxu0 0.0
    %147 = vmatprep.subr.mxu0 0.0
    %148 = vmatpush1.msra.mxu0 0.0
    %149 = vmatprep.subr.mxu0 0.0
    %150 = vmatpush1.msra.mxu0 0.0
    %151 = vmatprep.subr.mxu0 0.0
    %152 = vmatpush1.msra.mxu0 0.0
    %153 = vmatprep.subr.mxu0 0.0
    %154 = vmatpush1.msra.mxu0 0.0
    %155 = vmatprep.subr.mxu0 0.0
    %156 = vmatpush1.msra.mxu0 0.0
    %157 = vmatprep.subr.mxu0 0.0
    %158 = vmatpush1.msra.mxu0 0.0
    %159 = vmatprep.subr.mxu0 0.0
    %160 = vmatpush1.msra.mxu0 0.0
    %161 = vmatprep.subr.mxu0 0.0
    %162 = vmatpush1.msra.mxu0 0.0
    %163 = vmatprep.subr.mxu0 0.0
    %164 = vmatpush1.msra.mxu0 0.0
    %165 = vmatprep.subr.mxu0 0.0
    %166 = vmatpush1.msra.mxu0 0.0
    %167 = vmatprep.subr.mxu0 0.0
    %168 = vmatpush1.msra.mxu0 0.0
    %169 = vmatprep.subr.mxu0 0.0
    %170 = vmatpush1.msra.mxu0 0.0
    %171 = vmatprep.mubr.f32.mxu0 0.0
    %172 = vmatmul.mubr.f32.gmra.mrb[0].mxu0 %v82
    %v173 = vpop.f32.mrb[0].mxu0
    %v174 = vadd.f32 %v105, %v173
    %v175 = vpop.f32.mrb[0].mxu0
    %176 = vmatprep.mubr.f32.mxu0 0.0
    %177 = vmatmul.mubr.f32.gmra.mrb[0].mxu0 %v83
    %v178 = vpop.f32.mrb[0].mxu0
    %v179 = vadd.f32 %v105, %v178
    %v180 = vpop.f32.mrb[0].mxu0
    %181 = vdwg.mxu0
    %v182 = vxor.u32 %v174, 2147483648
    %v183 = vxor.u32 %v179, 2147483648
    %v184 = vmul.f32 %v182, 1.442695
    %v185 = vpow.pop %v184
    %v186 = vmul.f32 %v183, 1.442695
    %v187 = vpow.pop %v186
    %v188 = vadd.f32 %v185, 1.0
    %v189 = vadd.f32 %v187, 1.0
    %v190 = vrcp.pop %v188
    %v191 = vmul.f32 1.0, %v190
    %v192 = vrcp.pop %v189
    %v193 = vmul.f32 1.0, %v192
    %v194 = vmul.f32 %v174, %v191
    %v195 = vmul.f32 %v179, %v193
    %v196 = vld [vmem:[#allocation7] sm:$0xff]
    %v197 = vld [vmem:[#allocation7 + $0x8] sm:$0xff]
    %v198 = vld [vmem:[#allocation7 + $0x10] sm:$0xff]
    %v199 = vld [vmem:[#allocation7 + $0x18] sm:$0xff]
    %v200 = vld [vmem:[#allocation7 + $0x20] sm:$0xff]
    %v201 = vld [vmem:[#allocation7 + $0x28] sm:$0xff]
    %v202 = vld [vmem:[#allocation7 + $0x30] sm:$0xff]
    %v203 = vld [vmem:[#allocation7 + $0x38] sm:$0xff]
    %v204 = vld [vmem:[#allocation7 + $0x40] sm:$0xff]
    %v205 = vld [vmem:[#allocation7 + $0x48] sm:$0xff]
    %v206 = vld [vmem:[#allocation7 + $0x50] sm:$0xff]
    %v207 = vld [vmem:[#allocation7 + $0x58] sm:$0xff]
    %v208 = vld [vmem:[#allocation7 + $0x60] sm:$0xff]
    %v209 = vld [vmem:[#allocation7 + $0x68] sm:$0xff]
    %v210 = vld [vmem:[#allocation7 + $0x70] sm:$0xff]
    %v211 = vld [vmem:[#allocation7 + $0x78] sm:$0xff]
    %v212 = vld [vmem:[%s4] sm:$0x1]
    %v214 = vlaneseq
    %v215 = vshrl.u32 %v214, 7
    %v216 = vsub.s32 0, %v215
    %v217 = vrot.slane %v212, %v216
    %219 = vmatprep.subr.mxu0 0.0
    %220 = vmatpush1.msra.mxu0 %v196
    %221 = vmatprep.subr.mxu0 0.0
    %222 = vmatpush1.msra.mxu0 %v197
    %223 = vmatprep.subr.mxu0 0.0
    %224 = vmatpush1.msra.mxu0 %v198
    %225 = vmatprep.subr.mxu0 0.0
    %226 = vmatpush1.msra.mxu0 %v199
    %227 = vmatprep.subr.mxu0 0.0
    %228 = vmatpush1.msra.mxu0 %v200
    %229 = vmatprep.subr.mxu0 0.0
    %230 = vmatpush1.msra.mxu0 %v201
    %231 = vmatprep.subr.mxu0 0.0
    %232 = vmatpush1.msra.mxu0 %v202
    %233 = vmatprep.subr.mxu0 0.0
    %234 = vmatpush1.msra.mxu0 %v203
    %235 = vmatprep.subr.mxu0 0.0
    %236 = vmatpush1.msra.mxu0 %v204
    %237 = vmatprep.subr.mxu0 0.0
    %238 = vmatpush1.msra.mxu0 %v205
    %239 = vmatprep.subr.mxu0 0.0
    %240 = vmatpush1.msra.mxu0 %v206
    %241 = vmatprep.subr.mxu0 0.0
    %242 = vmatpush1.msra.mxu0 %v207
    %243 = vmatprep.subr.mxu0 0.0
    %244 = vmatpush1.msra.mxu0 %v208
    %245 = vmatprep.subr.mxu0 0.0
    %246 = vmatpush1.msra.mxu0 %v209
    %247 = vmatprep.subr.mxu0 0.0
    %248 = vmatpush1.msra.mxu0 %v210
    %249 = vmatprep.subr.mxu0 0.0
    %250 = vmatpush1.msra.mxu0 %v211
    %251 = vmatprep.subr.mxu0 0.0
    %252 = vmatpush1.msra.mxu0 0.0
    %253 = vmatprep.subr.mxu0 0.0
    %254 = vmatpush1.msra.mxu0 0.0
    %255 = vmatprep.subr.mxu0 0.0
    %256 = vmatpush1.msra.mxu0 0.0
    %257 = vmatprep.subr.mxu0 0.0
    %258 = vmatpush1.msra.mxu0 0.0
    %259 = vmatprep.subr.mxu0 0.0
    %260 = vmatpush1.msra.mxu0 0.0
    %261 = vmatprep.subr.mxu0 0.0
    %262 = vmatpush1.msra.mxu0 0.0
    %263 = vmatprep.subr.mxu0 0.0
    %264 = vmatpush1.msra.mxu0 0.0
    %265 = vmatprep.subr.mxu0 0.0
    %266 = vmatpush1.msra.mxu0 0.0
    %267 = vmatprep.subr.mxu0 0.0
    %268 = vmatpush1.msra.mxu0 0.0
    %269 = vmatprep.subr.mxu0 0.0
    %270 = vmatpush1.msra.mxu0 0.0
    %271 = vmatprep.subr.mxu0 0.0
    %272 = vmatpush1.msra.mxu0 0.0
    %273 = vmatprep.subr.mxu0 0.0
    %274 = vmatpush1.msra.mxu0 0.0
    %275 = vmatprep.subr.mxu0 0.0
    %276 = vmatpush1.msra.mxu0 0.0
    %277 = vmatprep.subr.mxu0 0.0
    %278 = vmatpush1.msra.mxu0 0.0
    %279 = vmatprep.subr.mxu0 0.0
    %280 = vmatpush1.msra.mxu0 0.0
    %281 = vmatprep.subr.mxu0 0.0
    %282 = vmatpush1.msra.mxu0 0.0
    %283 = vmatprep.mubr.f32.mxu0 0.0
    %284 = vmatmul.mubr.f32.gmra.mrb[0].mxu0 %v194
    %v285 = vpop.f32.mrb[0].mxu0
    %v286 = vadd.f32 %v217, %v285
    %v287 = vpop.f32.mrb[0].mxu0
    %288 = vmatprep.mubr.f32.mxu0 0.0
    %289 = vmatmul.mubr.f32.gmra.mrb[0].mxu0 %v195
    %v290 = vpop.f32.mrb[0].mxu0
    %v291 = vadd.f32 %v217, %v290
    %v292 = vpop.f32.mrb[0].mxu0
    %293 = vdwg.mxu0
    %v294 = vxor.u32 %v286, 2147483648
    %v295 = vxor.u32 %v291, 2147483648
    %v296 = vmul.f32 %v294, 1.442695
    %v297 = vpow.pop %v296
    %v298 = vmul.f32 %v295, 1.442695
    %v299 = vpow.pop %v298
    %v300 = vadd.f32 %v297, 1.0
    %v301 = vadd.f32 %v299, 1.0
    %v302 = vrcp.pop %v300
    %v303 = vmul.f32 1.0, %v302
    %v304 = vrcp.pop %v301
    %v305 = vmul.f32 1.0, %v304
    %v306 = vmul.f32 %v286, %v303
    %v307 = vmul.f32 %v291, %v305
    %v308 = vld [vmem:[#allocation8] sm:$0xff]
    %v309 = vld [vmem:[#allocation8 + $0x8] sm:$0xff]
    %v310 = vld [vmem:[#allocation8 + $0x10] sm:$0xff]
    %v311 = vld [vmem:[#allocation8 + $0x18] sm:$0xff]
    %v312 = vld [vmem:[#allocation8 + $0x20] sm:$0xff]
    %v313 = vld [vmem:[#allocation8 + $0x28] sm:$0xff]
    %v314 = vld [vmem:[#allocation8 + $0x30] sm:$0xff]
    %v315 = vld [vmem:[#allocation8 + $0x38] sm:$0xff]
    %v316 = vld [vmem:[#allocation8 + $0x40] sm:$0xff]
    %v317 = vld [vmem:[#allocation8 + $0x48] sm:$0xff]
    %v318 = vld [vmem:[#allocation8 + $0x50] sm:$0xff]
    %v319 = vld [vmem:[#allocation8 + $0x58] sm:$0xff]
    %v320 = vld [vmem:[#allocation8 + $0x60] sm:$0xff]
    %v321 = vld [vmem:[#allocation8 + $0x68] sm:$0xff]
    %v322 = vld [vmem:[#allocation8 + $0x70] sm:$0xff]
    %v323 = vld [vmem:[#allocation8 + $0x78] sm:$0xff]
    %v324 = vld [vmem:[%s6] sm:$0x1]
    %v326 = vlaneseq
    %v327 = vshrl.u32 %v326, 7
    %v328 = vsub.s32 0, %v327
    %v329 = vrot.slane %v324, %v328
    %331 = vmatprep.subr.mxu0 0.0
    %332 = vmatpush1.msra.mxu0 %v308
    %333 = vmatprep.subr.mxu0 0.0
    %334 = vmatpush1.msra.mxu0 %v309
    %335 = vmatprep.subr.mxu0 0.0
    %336 = vmatpush1.msra.mxu0 %v310
    %337 = vmatprep.subr.mxu0 0.0
    %338 = vmatpush1.msra.mxu0 %v311
    %339 = vmatprep.subr.mxu0 0.0
    %340 = vmatpush1.msra.mxu0 %v312
    %341 = vmatprep.subr.mxu0 0.0
    %342 = vmatpush1.msra.mxu0 %v313
    %343 = vmatprep.subr.mxu0 0.0
    %344 = vmatpush1.msra.mxu0 %v314
    %345 = vmatprep.subr.mxu0 0.0
    %346 = vmatpush1.msra.mxu0 %v315
    %347 = vmatprep.subr.mxu0 0.0
    %348 = vmatpush1.msra.mxu0 %v316
    %349 = vmatprep.subr.mxu0 0.0
    %350 = vmatpush1.msra.mxu0 %v317
    %351 = vmatprep.subr.mxu0 0.0
    %352 = vmatpush1.msra.mxu0 %v318
    %353 = vmatprep.subr.mxu0 0.0
    %354 = vmatpush1.msra.mxu0 %v319
    %355 = vmatprep.subr.mxu0 0.0
    %356 = vmatpush1.msra.mxu0 %v320
    %357 = vmatprep.subr.mxu0 0.0
    %358 = vmatpush1.msra.mxu0 %v321
    %359 = vmatprep.subr.mxu0 0.0
    %360 = vmatpush1.msra.mxu0 %v322
    %361 = vmatprep.subr.mxu0 0.0
    %362 = vmatpush1.msra.mxu0 %v323
    %363 = vmatprep.subr.mxu0 0.0
    %364 = vmatpush1.msra.mxu0 0.0
    %365 = vmatprep.subr.mxu0 0.0
    %366 = vmatpush1.msra.mxu0 0.0
    %367 = vmatprep.subr.mxu0 0.0
    %368 = vmatpush1.msra.mxu0 0.0
    %369 = vmatprep.subr.mxu0 0.0
    %370 = vmatpush1.msra.mxu0 0.0
    %371 = vmatprep.subr.mxu0 0.0
    %372 = vmatpush1.msra.mxu0 0.0
    %373 = vmatprep.subr.mxu0 0.0
    %374 = vmatpush1.msra.mxu0 0.0
    %375 = vmatprep.subr.mxu0 0.0
    %376 = vmatpush1.msra.mxu0 0.0
    %377 = vmatprep.subr.mxu0 0.0
    %378 = vmatpush1.msra.mxu0 0.0
    %379 = vmatprep.subr.mxu0 0.0
    %380 = vmatpush1.msra.mxu0 0.0
    %381 = vmatprep.subr.mxu0 0.0
    %382 = vmatpush1.msra.mxu0 0.0
    %383 = vmatprep.subr.mxu0 0.0
    %384 = vmatpush1.msra.mxu0 0.0
    %385 = vmatprep.subr.mxu0 0.0
    %386 = vmatpush1.msra.mxu0 0.0
    %387 = vmatprep.subr.mxu0 0.0
    %388 = vmatpush1.msra.mxu0 0.0
    %389 = vmatprep.subr.mxu0 0.0
    %390 = vmatpush1.msra.mxu0 0.0
    %391 = vmatprep.subr.mxu0 0.0
    %392 = vmatpush1.msra.mxu0 0.0
    %393 = vmatprep.subr.mxu0 0.0
    %394 = vmatpush1.msra.mxu0 0.0
    %395 = vmatprep.mubr.f32.mxu0 0.0
    %396 = vmatmul.mubr.f32.gmra.mrb[0].mxu0 %v306
    %v397 = vpop.f32.mrb[0].mxu0
    %v398 = vadd.f32 %v329, %v397
    %v399 = vpop.f32.mrb[0].mxu0
    %400 = vmatprep.mubr.f32.mxu0 0.0
    %401 = vmatmul.mubr.f32.gmra.mrb[0].mxu0 %v307
    %v402 = vpop.f32.mrb[0].mxu0
    %v403 = vadd.f32 %v329, %v402
    %v404 = vpop.f32.mrb[0].mxu0
    %405 = vdwg.mxu0
    %406 = vst [vmem:[#allocation10] sm:$0xff] %v398
    %407 = vst [vmem:[#allocation10 + $0x8] sm:$0xff] %v403
    // Predicated region
    $region46: #{tpu_custom_call.1} parent=1 // pred_check
      _
    $region47: #{tpu_custom_call.1} parent=1 // pred_check_branch
      %409 = sbr.rel (0) target = $region49
    $region48: #{tpu_custom_call.1} parent=1 // pred_region
      %s411 = ssub.s32 256, 256
      %412 = vsyncadd [#allocation4], %s411
      %s413 = sshll.u32 [#allocation10], 4
      %s414 = int_to_ptr.vmem [resolvable:$true] %s413
      %419 = dma.vmem_to_hbm [thread:$0]  %s414, 256, %s7, [#allocation4], 128, 128, 8
    $region49: #{tpu_custom_call.1} parent=1 // pred_fallthru
      _
    // Predicated region
    $region50: #{tpu_custom_call.1} parent=1 // pred_check
      _
    $region51: #{tpu_custom_call.1} parent=1 // pred_check_branch
      %421 = sbr.rel (0) target = $region53
    $region52: #{tpu_custom_call.1} parent=1 // pred_region
      %422 = dma.done [#allocation4], 256
    $region53: #{tpu_custom_call.1} parent=1 // pred_fallthru
      _
    %423 = vsyncpa [#allocation3], 1
    %424 = vsyncpa [#allocation6], 1
    %425 = vsyncpa [#allocation9], 1
    %426 = vsyncpa [#allocation4], 1

</llo_original>
